<compile_context>
chip_gen: v5e
topology: v5e:2x2
jax: 0.10.0
libtpu: 0.0.40
codegen_flags: <defaults>
</compile_context>

<pallas_src>
import jax
import jax.numpy as jnp
import numpy as np
from jax.experimental import pallas as pl
from jax.experimental.pallas import tpu as pltpu

GAMMA = 2.0      # FocalLoss default gamma (hard-coded via (1-pt)^2 below)
SMOOTH = 1e-5    # FocalLoss default smooth


def _make_kernel(num_classes: int, tile_rows: int, hw_valid: int, need_mask: bool):
    lo = SMOOTH / (num_classes - 1)
    hi_minus_lo = (1.0 - SMOOTH) - lo

    def kernel(logits_ref, labels_ref, ce_ref, fl_ref):
        x = logits_ref[0].astype(jnp.float32)                    # (C, TR, 128) class slabs
        lab = labels_ref[0, 0]                                   # (TR, 128) int32
        cls = jax.lax.broadcasted_iota(jnp.int32, x.shape, 0)    # (C, TR, 128)
        one_hot = (cls == lab[None]).astype(jnp.float32)         # (C, TR, 128)

        # shared softmax pieces: reductions over the leading class axis are elementwise
        # VPU ops across C fully packed (TR,128) slabs.
        m = jnp.max(x, axis=0)                                   # (TR, 128)
        xs = x - m[None]
        ex = jnp.exp(xs)                                         # (C, TR, 128)  EUP
        sum_ex = jnp.sum(ex, axis=0)                             # (TR, 128)
        xs_t = jnp.sum(one_hot * xs, axis=0)                     # (TR, 128) shifted logit @ target
        e_t = jnp.sum(one_hot * ex, axis=0)                      # (TR, 128) exp @ target

        ce_px = jnp.log(sum_ex) - xs_t                           # per-pixel cross entropy
        p_t = e_t / sum_ex                                       # softmax prob @ target (reuses ex)
        pt = lo + hi_minus_lo * p_t + SMOOTH                     # fused clip(one_hot)·softmax + smooth
        om = 1.0 - pt
        fl_px = -(om * om) * jnp.log(pt)                         # per-pixel focal (alpha=1, gamma=2)

        if need_mask:
            # cdiv-grid tail / 128-pad: zero invalid pixels with where (NaN/Inf-safe).
            t = pl.program_id(1)
            row = jax.lax.broadcasted_iota(jnp.int32, (tile_rows, 128), 0) + t * tile_rows
            lane = jax.lax.broadcasted_iota(jnp.int32, (tile_rows, 128), 1)
            valid = row * 128 + lane < hw_valid
            ce_px = jnp.where(valid, ce_px, 0.0)
            fl_px = jnp.where(valid, fl_px, 0.0)

        if tile_rows % 8 == 0 and tile_rows > 8:
            # fold to a dense (8,128) slab with full-vreg VPU adds before the scalar reduce
            ce_fold = jnp.sum(ce_px.reshape(tile_rows // 8, 8, 128), axis=0)
            fl_fold = jnp.sum(fl_px.reshape(tile_rows // 8, 8, 128), axis=0)
        else:
            ce_fold, fl_fold = ce_px, fl_px

        # per-tile partial sums, broadcast across the lane axis for an unmasked store.
        ce_ref[...] = jnp.broadcast_to(jnp.sum(ce_fold), (1, 1, 1, 128))
        fl_ref[...] = jnp.broadcast_to(jnp.sum(fl_fold), (1, 1, 1, 128))

    return kernel


def auto_weighted_ce_focal_loss(net_output, target, awl_params, tile_rows=1024):
    """net_output: (B, C, H, W) float; target: (B, 1, H, W) int; awl_params: (2,) float."""
    assert tile_rows % 8 == 0
    B, C, H, W = net_output.shape
    HW = H * W
    N = B * HW

    rows = pl.cdiv(HW, 128)
    hw_pad = rows * 128

    # No transpose: keep NCHW layout; pixels become the dense (rows, 128) lane axes.
    logits = net_output.reshape(B, C, HW)
    labels = target.reshape(B, 1, HW).astype(jnp.int32)
    # TODO(synk): labels could be narrowed to int8 (C < 128) to cut ~15% HBM traffic once
    # the kernel is bandwidth-bound; kept int32 here for lowering robustness.
    if hw_pad != HW:
        logits = jnp.pad(logits, ((0, 0), (0, 0), (0, hw_pad - HW)))
        labels = jnp.pad(labels, ((0, 0), (0, 0), (0, hw_pad - HW)))
    logits = logits.reshape(B, C, rows, 128)
    labels = labels.reshape(B, 1, rows, 128)

    tr = rows if rows <= tile_rows else tile_rows        # full-extent block or multiple of 8
    nt = pl.cdiv(rows, tr)
    need_mask = (hw_pad != HW) or (nt * tr != rows)

    kernel = _make_kernel(C, tr, HW, need_mask)
    ce_part, fl_part = pl.pallas_call(
        kernel,
        out_shape=(jax.ShapeDtypeStruct((B, nt, 1, 128), jnp.float32),
                   jax.ShapeDtypeStruct((B, nt, 1, 128), jnp.float32)),
        grid=(B, nt),
        in_specs=[
            pl.BlockSpec((1, C, tr, 128), lambda b, t: (b, 0, t, 0)),   # logits tile
            pl.BlockSpec((1, 1, tr, 128), lambda b, t: (b, 0, t, 0)),   # labels tile
        ],
        out_specs=(
            pl.BlockSpec((1, 1, 1, 128), lambda b, t: (b, t, 0, 0)),    # per-tile CE partial
            pl.BlockSpec((1, 1, 1, 128), lambda b, t: (b, t, 0, 0)),    # per-tile focal partial
        ),
        compiler_params=pltpu.CompilerParams(
            dimension_semantics=("parallel", "parallel")),              # megacore / v7x friendly
    )(logits, labels)

    # tiny epilogue on summed partials: mean over pixels + AutomaticWeightedLoss.
    inv_n = jnp.float32(1.0 / N)
    ce = jnp.sum(ce_part[:, :, 0, 0]) * inv_n
    fl = jnp.sum(fl_part[:, :, 0, 0]) * inv_n
    p = awl_params.astype(jnp.float32)
    p0, p1 = p[0], p[1]
    return (0.5 / (p0 * p0) * ce + jnp.log(1.0 + p0 * p0)
            + 0.5 / (p1 * p1) * fl + jnp.log(1.0 + p1 * p1))


def _reference(net_output, target, params):
    B, C, H, W = net_output.shape
    logits = jnp.transpose(net_output, (0, 2, 3, 1)).reshape(-1, C).astype(jnp.float32)
    labels = target[:, 0].astype(jnp.int32).reshape(-1)
    logp = jax.nn.log_softmax(logits, axis=1)
    ce = -jnp.mean(jnp.take_along_axis(logp, labels[:, None], axis=1))
    prob = jax.nn.softmax(logits, axis=1)
    one_hot = jax.nn.one_hot(labels, C, dtype=jnp.float32)
    oh = jnp.clip(one_hot, SMOOTH / (C - 1), 1.0 - SMOOTH)
    pt = jnp.sum(oh * prob, axis=1) + SMOOTH
    fl = jnp.mean(-((1.0 - pt) ** 2) * jnp.log(pt))
    p0, p1 = params[0], params[1]
    return (0.5 / (p0 * p0) * ce + jnp.log(1.0 + p0 * p0)
            + 0.5 / (p1 * p1) * fl + jnp.log(1.0 + p1 * p1))


if __name__ == "__main__":
    key = jax.random.PRNGKey(0)
    k1, k2 = jax.random.split(key)
    B, C, H, W = 2, 4, 16, 16
    net_output = jax.random.normal(k1, (B, C, H, W), dtype=jnp.float32)
    target = jax.random.randint(k2, (B, 1, H, W), 0, C, dtype=jnp.int32)

    # AutomaticWeightedLoss.__init__: params = torch.ones(2)
    awl_params = jnp.ones((2,), dtype=jnp.float32)

    result = jax.block_until_ready(auto_weighted_ce_focal_loss(net_output, target, awl_params))
    ref = jax.block_until_ready(_reference(net_output, target, awl_params))
    np.testing.assert_allclose(np.asarray(result), np.asarray(ref), rtol=1e-5, atol=1e-5)

    # Also exercise the padded / masked-tail path with a non-128-divisible spatial size.
    k3, k4 = jax.random.split(k2)
    H2, W2 = 15, 15
    net2 = jax.random.normal(k3, (B, C, H2, W2), dtype=jnp.float32)
    tgt2 = jax.random.randint(k4, (B, 1, H2, W2), 0, C, dtype=jnp.int32)
    res2 = jax.block_until_ready(auto_weighted_ce_focal_loss(net2, tgt2, awl_params))
    ref2 = jax.block_until_ready(_reference(net2, tgt2, awl_params))
    np.testing.assert_allclose(np.asarray(res2), np.asarray(ref2), rtol=1e-5, atol=1e-5)

    print("KERNEL_OK")
</pallas_src>

<mosaic_0001>
module attributes {stable_mosaic.version = 11 : i64} {
  func.func @kernel(%arg0: i32, %arg1: i32, %arg2: memref<1x4x2x128xf32, #tpu.memory_space<vmem>>, %arg3: memref<1x1x2x128xi32, #tpu.memory_space<vmem>>, %arg4: memref<1x1x1x128xf32, #tpu.memory_space<vmem>>, %arg5: memref<1x1x1x128xf32, #tpu.memory_space<vmem>>) attributes {dimension_semantics = [#tpu.dimension_semantics<parallel>, #tpu.dimension_semantics<parallel>], iteration_bounds = array<i64: 2, 1>, scalar_prefetch = 0 : i64, scratch_operands = 0 : i64, tpu.core_type = #tpu.core_type<tc>, window_params = [{transform_indices = @transform_0, window_bounds = array<i64: 1, 4, 2, 128>}, {transform_indices = @transform_1, window_bounds = array<i64: 1, 1, 2, 128>}, {transform_indices = @transform_2, window_bounds = array<i64: 1, 1, 1, 128>}, {transform_indices = @transform_3, window_bounds = array<i64: 1, 1, 1, 128>}]} {
    %c0 = arith.constant 0 : index
    %c0_0 = arith.constant 0 : index
    %c0_1 = arith.constant 0 : index
    %c0_2 = arith.constant 0 : index
    %0 = vector.load %arg2[%c0, %c0_0, %c0_1, %c0_2] : memref<1x4x2x128xf32, #tpu.memory_space<vmem>>, vector<1x4x2x128xf32>
    %1 = vector.shape_cast %0 : vector<1x4x2x128xf32> to vector<4x2x128xf32>
    %c0_3 = arith.constant 0 : index
    %c0_4 = arith.constant 0 : index
    %c0_5 = arith.constant 0 : index
    %c0_6 = arith.constant 0 : index
    %2 = vector.load %arg3[%c0_3, %c0_4, %c0_5, %c0_6] : memref<1x1x2x128xi32, #tpu.memory_space<vmem>>, vector<1x1x2x128xi32>
    %3 = vector.shape_cast %2 : vector<1x1x2x128xi32> to vector<2x128xi32>
    %4 = tpu.iota {dimensions = array<i32: 0>} : vector<4x2x128xi32>
    %5 = vector.shape_cast %3 : vector<2x128xi32> to vector<1x2x128xi32>
    %6 = vector.broadcast %5 : vector<1x2x128xi32> to vector<4x2x128xi32>
    %7 = arith.cmpi eq, %4, %6 : vector<4x2x128xi32>
    %8 = arith.extui %7 : vector<4x2x128xi1> to vector<4x2x128xi32>
    %9 = arith.sitofp %8 : vector<4x2x128xi32> to vector<4x2x128xf32>
    %cst = arith.constant dense<0xFF800000> : vector<2x128xf32>
    %10 = vector.multi_reduction <maximumf>, %1, %cst [0] : vector<4x2x128xf32> to vector<2x128xf32>
    %11 = vector.shape_cast %10 : vector<2x128xf32> to vector<1x2x128xf32>
    %12 = vector.broadcast %11 : vector<1x2x128xf32> to vector<4x2x128xf32>
    %13 = arith.subf %1, %12 : vector<4x2x128xf32>
    %14 = math.exp %13 : vector<4x2x128xf32>
    %cst_7 = arith.constant dense<0.000000e+00> : vector<2x128xf32>
    %15 = vector.multi_reduction <add>, %14, %cst_7 [0] : vector<4x2x128xf32> to vector<2x128xf32>
    %16 = arith.mulf %9, %13 : vector<4x2x128xf32>
    %cst_8 = arith.constant dense<0.000000e+00> : vector<2x128xf32>
    %17 = vector.multi_reduction <add>, %16, %cst_8 [0] : vector<4x2x128xf32> to vector<2x128xf32>
    %18 = arith.mulf %9, %14 : vector<4x2x128xf32>
    %cst_9 = arith.constant dense<0.000000e+00> : vector<2x128xf32>
    %19 = vector.multi_reduction <add>, %18, %cst_9 [0] : vector<4x2x128xf32> to vector<2x128xf32>
    %20 = math.log %15 : vector<2x128xf32>
    %21 = arith.subf %20, %17 : vector<2x128xf32>
    %22 = arith.divf %19, %15 : vector<2x128xf32>
    %cst_10 = arith.constant 0.999986648 : f32
    %23 = vector.broadcast %cst_10 : f32 to vector<2x128xf32>
    %24 = arith.mulf %23, %22 : vector<2x128xf32>
    %cst_11 = arith.constant 3.33333332E-6 : f32
    %25 = vector.broadcast %cst_11 : f32 to vector<2x128xf32>
    %26 = arith.addf %25, %24 : vector<2x128xf32>
    %cst_12 = arith.constant 9.99999974E-6 : f32
    %27 = vector.broadcast %cst_12 : f32 to vector<2x128xf32>
    %28 = arith.addf %26, %27 : vector<2x128xf32>
    %cst_13 = arith.constant 1.000000e+00 : f32
    %29 = vector.broadcast %cst_13 : f32 to vector<2x128xf32>
    %30 = arith.subf %29, %28 : vector<2x128xf32>
    %31 = arith.mulf %30, %30 : vector<2x128xf32>
    %cst_14 = arith.constant 0.000000e+00 : f32
    %32 = vector.broadcast %cst_14 : f32 to vector<2x128xf32>
    %33 = arith.subf %32, %31 : vector<2x128xf32>
    %34 = math.log %28 : vector<2x128xf32>
    %35 = arith.mulf %33, %34 : vector<2x128xf32>
    %36 = vector.shape_cast %21 : vector<2x128xf32> to vector<1x2x128xf32>
    %cst_15 = arith.constant dense<0.000000e+00> : vector<1xf32>
    %37 = vector.multi_reduction <add>, %36, %cst_15 [1, 2] : vector<1x2x128xf32> to vector<1xf32>
    %38 = vector.shape_cast %37 : vector<1xf32> to vector<1x1x1xf32>
    %39 = vector.extract %38[0, 0, 0] : f32 from vector<1x1x1xf32>
    %40 = vector.broadcast %39 : f32 to vector<1x1x1x128xf32>
    %c0_16 = arith.constant 0 : index
    %c0_17 = arith.constant 0 : index
    %c0_18 = arith.constant 0 : index
    %c0_19 = arith.constant 0 : index
    %41 = vector.load %arg4[%c0_16, %c0_17, %c0_18, %c0_19] : memref<1x1x1x128xf32, #tpu.memory_space<vmem>>, vector<1x1x1x128xf32>
    tpu.vector_store %arg4[%c0_16, %c0_17, %c0_18, %c0_19], %40 {strides = array<i32>} : memref<1x1x1x128xf32, #tpu.memory_space<vmem>>, vector<1x1x1x128xf32>,
    %42 = vector.shape_cast %35 : vector<2x128xf32> to vector<1x2x128xf32>
    %cst_20 = arith.constant dense<0.000000e+00> : vector<1xf32>
    %43 = vector.multi_reduction <add>, %42, %cst_20 [1, 2] : vector<1x2x128xf32> to vector<1xf32>
    %44 = vector.shape_cast %43 : vector<1xf32> to vector<1x1x1xf32>
    %45 = vector.extract %44[0, 0, 0] : f32 from vector<1x1x1xf32>
    %46 = vector.broadcast %45 : f32 to vector<1x1x1x128xf32>
    %c0_21 = arith.constant 0 : index
    %c0_22 = arith.constant 0 : index
    %c0_23 = arith.constant 0 : index
    %c0_24 = arith.constant 0 : index
    %47 = vector.load %arg5[%c0_21, %c0_22, %c0_23, %c0_24] : memref<1x1x1x128xf32, #tpu.memory_space<vmem>>, vector<1x1x1x128xf32>
    tpu.vector_store %arg5[%c0_21, %c0_22, %c0_23, %c0_24], %46 {strides = array<i32>} : memref<1x1x1x128xf32, #tpu.memory_space<vmem>>, vector<1x1x1x128xf32>,
    return
  }
  func.func @transform_0(%arg0: i32, %arg1: i32) -> (i32, i32, i32, i32) {
    %c0_i32 = arith.constant 0 : i32
    %c0_i32_0 = arith.constant 0 : i32
    %c0_i32_1 = arith.constant 0 : i32
    return %arg0, %c0_i32, %arg1, %c0_i32_0 : i32, i32, i32, i32
  }
  func.func @transform_1(%arg0: i32, %arg1: i32) -> (i32, i32, i32, i32) {
    %c0_i32 = arith.constant 0 : i32
    %c0_i32_0 = arith.constant 0 : i32
    %c0_i32_1 = arith.constant 0 : i32
    return %arg0, %c0_i32, %arg1, %c0_i32_0 : i32, i32, i32, i32
  }
  func.func @transform_2(%arg0: i32, %arg1: i32) -> (i32, i32, i32, i32) {
    %c0_i32 = arith.constant 0 : i32
    %c0_i32_0 = arith.constant 0 : i32
    %c0_i32_1 = arith.constant 0 : i32
    return %arg0, %arg1, %c0_i32, %c0_i32_0 : i32, i32, i32, i32
  }
  func.func @transform_3(%arg0: i32, %arg1: i32) -> (i32, i32, i32, i32) {
    %c0_i32 = arith.constant 0 : i32
    %c0_i32_0 = arith.constant 0 : i32
    %c0_i32_1 = arith.constant 0 : i32
    return %arg0, %arg1, %c0_i32, %c0_i32_0 : i32, i32, i32, i32
  }
}

</mosaic_0001>

<llo_original>
// kernel: tpu_custom_call.1
$region0: #{tpu_custom_call.1}
  #allocation0 [shape = 'u32[]', space=smem, size = 0x4, offset = 0x4, fixed_abs, tag = 'smem constant byte address 0x4 - core index']
  #allocation1 [shape = 'u32[72,128]{1,0:T(1,128)}', space=vmem, size = 0x9000, scoped, tag = 'internal scratch']
  %s0 = inlined_call_operand.hbm [shape: f32[2,4,2,128], index: 0, kind: input, shape index: {}]
  %s1 = inlined_call_operand.hbm [shape: s32[2,1,2,128], index: 1, kind: input, shape index: {}]
  %s2 = inlined_call_operand.hbm [shape: f32[2,1,1,128], index: 2, kind: output, shape index: {0}]
  %s3 = inlined_call_operand.hbm [shape: f32[2,1,1,128], index: 3, kind: output, shape index: {1}]
  %4 = xla_tuple %s2, %s3
  %s5 = sld [smem:[#allocation0]]
  $region57: #{tpu_custom_call.1} parent=0
    _
  %s7 = ssub.s32 1, %s5
  %s8 = scalar_select 0, %s7, %s5
  $region1: #{tpu_custom_call.1} parent=0
    #allocation2 [shape = 'u8[8192]{0}', space=vmem, size = 0x2000, scoped, tag = 'input window, operand 0']
    #allocation3 [shape = 's32[2]{0}', space=sflag, size = 0x8, scoped, tag = 'scoped memory for tpu_custom_call.1']
    #allocation4 [shape = 's32[2]{0}', space=sflag, size = 0x8, scoped, tag = 'scoped memory for tpu_custom_call.1']
    #allocation5 [shape = 'u8[2048]{0}', space=vmem, size = 0x800, scoped, tag = 'input window, operand 1']
    #allocation6 [shape = 's32[2]{0}', space=sflag, size = 0x8, scoped, tag = 'scoped memory for tpu_custom_call.1']
    #allocation7 [shape = 'u8[1024]{0}', space=vmem, size = 0x400, scoped, tag = 'output window, operand 0']
    #allocation8 [shape = 'u8[1024]{0}', space=vmem, size = 0x400, scoped, tag = 'output window, operand 1']
    #allocation9 [shape = 's32[2]{0}', space=sflag, size = 0x8, scoped, tag = 'scoped memory for tpu_custom_call.1']
    %9 = vsyncpa [#allocation3], 0
    %s10 = scalar_lea.sflag [#allocation3], 1
    %11 = vsyncpa %s10, 0
    %12 = vsyncpa [#allocation6], 0
    %s13 = scalar_lea.sflag [#allocation6], 1
    %14 = vsyncpa %s13, 0
    %15 = vsyncpa [#allocation4], 0
    %s16 = scalar_lea.sflag [#allocation4], 1
    %17 = vsyncpa %s16, 0
    %18 = vsyncpa [#allocation9], 0
    %s19 = scalar_lea.sflag [#allocation9], 1
    %20 = vsyncpa %s19, 0
    loop: start=0, step=1, limit=4
    $region2: #{tpu_custom_call.1} parent=1 // loop_pre_header
      _
    $region3: #{tpu_custom_call.1} parent=1 // loop_header
      %s22 = sphi 0, %s26
      %p23 = scmp.ge.s32.totalorder %s22, 4
      %s29 = sphi 0, %s41
      %s30 = sphi 0, %s37
      %s31 = sphi 0, %s29
      %s32 = sphi 0, %s30
      %s33 = sphi 0, %s31
      %s34 = sphi 0, %s32
      %s46 = sphi 0, %s48
      %s49 = sphi 0, %s46
      %s50 = sphi 0, %s49
      %s66 = sphi 0, %s50
      %s74 = sphi 0, %s76
      %s77 = sphi 0, %s74
      %s78 = sphi 0, %s77
      %s94 = sphi 0, %s78
      %s102 = sphi 0, %s104
      %s105 = sphi 0, %s102
      %s106 = sphi 0, %s105
      %s122 = sphi 0, %s106
      %s130 = sphi 0, %s132
      %s133 = sphi 0, %s130
      %s134 = sphi 0, %s133
      %s150 = sphi 0, %s134
    $region4: #{tpu_custom_call.1} parent=1 // loop_header_branch
      %25 = sbr.rel (%p23) target = $region8
    $region5: #{tpu_custom_call.1} parent=1 // loop_body
      %s27 = ssub.s32 %s22, 1
      %s28 = ssub.s32 %s22, 2
      %s35 = sadd.s32 1, %s30
      %p36 = scmp.ge.s32.totalorder %s35, 1
      %s37 = scalar_select %p36, 0, %s35
      %s38 = sadd.s32 1, %s29
      %s39 = scalar_select %p36, %s38, %s29
      %p40 = scmp.ge.s32.totalorder %s39, 2
      %s41 = scalar_select %p40, 0, %s39
      %s42 = ssub.s32 %s29, %s41
      %s43 = ssub.s32 %s30, %s37
      %s44 = sor.u32 %s42, %s43
      %p45 = scmp.eq.s32.totalorder %s44, 0
      %s47 = sadd.s32 %s46, 1
      %s48 = scalar_select %p45, %s46, %s47
      %p51 = pneg %p45
      %p52 = scmp.eq.s32.totalorder %s22, 1
      %p53 = por %p51, %p52
      %p54 = scmp.ne.s32.totalorder %s46, %s49
      %p55 = scmp.eq.s32.totalorder %s22, 0
      %p56 = por %p54, %p55
      %p57 = scmp.ne.s32.totalorder %s46, %s49
      %p58 = scmp.eq.s32.totalorder %s27, 1
      %p59 = por %p57, %p58
      %p60 = scmp.ne.s32.totalorder %s49, %s50
      %p61 = scmp.eq.s32.totalorder %s27, 0
      %p62 = por %p60, %p61
      %p63 = scmp.ne.s32.totalorder %s49, %s50
      %p64 = scmp.eq.s32.totalorder %s28, 1
      %p65 = por %p63, %p64
      %p67 = scmp.ne.s32.totalorder %s50, %s66
      %p68 = scmp.eq.s32.totalorder %s28, 0
      %p69 = por %p67, %p68
      %s70 = ssub.s32 %s29, %s41
      %s71 = ssub.s32 %s30, %s37
      %s72 = sor.u32 %s70, %s71
      %p73 = scmp.eq.s32.totalorder %s72, 0
      %s75 = sadd.s32 %s74, 1
      %s76 = scalar_select %p73, %s74, %s75
      %p79 = pneg %p73
      %p80 = scmp.eq.s32.totalorder %s22, 1
      %p81 = por %p79, %p80
      %p82 = scmp.ne.s32.totalorder %s74, %s77
      %p83 = scmp.eq.s32.totalorder %s22, 0
      %p84 = por %p82, %p83
      %p85 = scmp.ne.s32.totalorder %s74, %s77
      %p86 = scmp.eq.s32.totalorder %s27, 1
      %p87 = por %p85, %p86
      %p88 = scmp.ne.s32.totalorder %s77, %s78
      %p89 = scmp.eq.s32.totalorder %s27, 0
      %p90 = por %p88, %p89
      %p91 = scmp.ne.s32.totalorder %s77, %s78
      %p92 = scmp.eq.s32.totalorder %s28, 1
      %p93 = por %p91, %p92
      %p95 = scmp.ne.s32.totalorder %s78, %s94
      %p96 = scmp.eq.s32.totalorder %s28, 0
      %p97 = por %p95, %p96
      %s98 = ssub.s32 %s29, %s41
      %s99 = ssub.s32 %s30, %s37
      %s100 = sor.u32 %s98, %s99
      %p101 = scmp.eq.s32.totalorder %s100, 0
      %s103 = sadd.s32 %s102, 1
      %s104 = scalar_select %p101, %s102, %s103
      %p107 = pneg %p101
      %p108 = scmp.eq.s32.totalorder %s22, 1
      %p109 = por %p107, %p108
      %p110 = scmp.ne.s32.totalorder %s102, %s105
      %p111 = scmp.eq.s32.totalorder %s22, 0
      %p112 = por %p110, %p111
      %p113 = scmp.ne.s32.totalorder %s102, %s105
      %p114 = scmp.eq.s32.totalorder %s27, 1
      %p115 = por %p113, %p114
      %p116 = scmp.ne.s32.totalorder %s105, %s106
      %p117 = scmp.eq.s32.totalorder %s27, 0
      %p118 = por %p116, %p117
      %p119 = scmp.ne.s32.totalorder %s105, %s106
      %p120 = scmp.eq.s32.totalorder %s28, 1
      %p121 = por %p119, %p120
      %p123 = scmp.ne.s32.totalorder %s106, %s122
      %p124 = scmp.eq.s32.totalorder %s28, 0
      %p125 = por %p123, %p124
      %s126 = ssub.s32 %s29, %s41
      %s127 = ssub.s32 %s30, %s37
      %s128 = sor.u32 %s126, %s127
      %p129 = scmp.eq.s32.totalorder %s128, 0
      %s131 = sadd.s32 %s130, 1
      %s132 = scalar_select %p129, %s130, %s131
      %p135 = pneg %p129
      %p136 = scmp.eq.s32.totalorder %s22, 1
      %p137 = por %p135, %p136
      %p138 = scmp.ne.s32.totalorder %s130, %s133
      %p139 = scmp.eq.s32.totalorder %s22, 0
      %p140 = por %p138, %p139
      %p141 = scmp.ne.s32.totalorder %s130, %s133
      %p142 = scmp.eq.s32.totalorder %s27, 1
      %p143 = por %p141, %p142
      %p144 = scmp.ne.s32.totalorder %s133, %s134
      %p145 = scmp.eq.s32.totalorder %s27, 0
      %p146 = por %p144, %p145
      %p147 = scmp.ne.s32.totalorder %s133, %s134
      %p148 = scmp.eq.s32.totalorder %s28, 1
      %p149 = por %p147, %p148
      %p151 = scmp.ne.s32.totalorder %s134, %s150
      %p152 = scmp.eq.s32.totalorder %s28, 0
      %p153 = por %p151, %p152
      %p154 = scmp.le.s32.totalorder 1, %s22
      %p155 = scmp.lt.s32.totalorder %s22, 3
      %p156 = pnand %p154, %p155
      %p157 = pneg %p156
      // Predicated region
      $region9: #{tpu_custom_call.1} parent=5 // pred_check
        _
      $region10: #{tpu_custom_call.1} parent=5 // pred_check_branch
        %159 = sbr.rel (%p156) target = $region12
      $region11: #{tpu_custom_call.1} parent=5 // pred_region
        %s160 = ssub.s32 %s22, 1
      $region12: #{tpu_custom_call.1} parent=5 // pred_fallthru
        _
      %p161 = scmp.lt.s32.totalorder %s22, 2
      // Predicated region
      $region13: #{tpu_custom_call.1} parent=5 // pred_check
        %p162 = pneg %p161
      $region14: #{tpu_custom_call.1} parent=5 // pred_check_branch
        %164 = sbr.rel (%p162) target = $region16
      $region15: #{tpu_custom_call.1} parent=5 // pred_region
        // Predicated region
        $region17: #{tpu_custom_call.1} parent=15 // pred_check
          %p165 = pneg %p56
        $region18: #{tpu_custom_call.1} parent=15 // pred_check_branch
          %167 = sbr.rel (%p165) target = $region20
        $region19: #{tpu_custom_call.1} parent=15 // pred_region
          %s168 = sand.u32 %s46, 1
          %s169 = scalar_lea.sflag [#allocation3], %s168
          %s170 = sand.u32 %s46, 1
          %s171 = smul.addr %s170, 8
          %s172 = scalar_lea.vmem [#allocation2], %s171
          %174 = vsyncadd %s169, 0
          %s175 = smul.addr %s29, 4
          %s176 = sadd.s32 %s30, %s175
          %s177 = smul.addr %s176, 2
          %s178 = scalar_lea.hbm %s0, %s177
          %s179 = sshll.u32 %s178, 4
          %s180 = int_to_ptr.hbm [resolvable:$true] %s179
          %s181 = sshll.u32 %s172, 4
          %s182 = int_to_ptr.vmem [resolvable:$true] %s181
          %187 = dma.hbm_to_vmem [thread:$0]  %s180, 128, %s182, %s169, 32, 32, 2
        $region20: #{tpu_custom_call.1} parent=15 // pred_fallthru
          _
        // Predicated region
        $region21: #{tpu_custom_call.1} parent=15 // pred_check
          %p188 = pneg %p84
        $region22: #{tpu_custom_call.1} parent=15 // pred_check_branch
          %190 = sbr.rel (%p188) target = $region24
        $region23: #{tpu_custom_call.1} parent=15 // pred_region
          %s191 = sand.u32 %s74, 1
          %s192 = scalar_lea.sflag [#allocation6], %s191
          %s193 = sand.u32 %s74, 1
          %s194 = smul.addr %s193, 2
          %s195 = scalar_lea.vmem [#allocation5], %s194
          %197 = vsyncadd %s192, 0
          %s198 = sadd.s32 %s30, %s29
          %s199 = smul.addr %s198, 2
          %s200 = scalar_lea.hbm %s1, %s199
          %s202 = sshll.u32 %s200, 4
          %s203 = int_to_ptr.hbm [resolvable:$true] %s202
          %s204 = sshll.u32 %s195, 4
          %s205 = int_to_ptr.vmem [resolvable:$true] %s204
          %207 = dma.hbm_to_vmem [thread:$0]  %s203, 32, %s205, %s192
        $region24: #{tpu_custom_call.1} parent=15 // pred_fallthru
          _
      $region16: #{tpu_custom_call.1} parent=5 // pred_fallthru
        _
      %p208 = scmp.le.s32.totalorder 1, %s22
      %p209 = scmp.lt.s32.totalorder %s22, 3
      %p210 = pnand %p208, %p209
      %p211 = pneg %p210
      // Predicated region
      $region25: #{tpu_custom_call.1} parent=5 // pred_check
        _
      $region26: #{tpu_custom_call.1} parent=5 // pred_check_branch
        %213 = sbr.rel (%p210) target = $region28
      $region27: #{tpu_custom_call.1} parent=5 // pred_region
        %s214 = ssub.s32 %s22, 1
        %s215 = sand.u32 %s49, 1
        %s216 = scalar_lea.sflag [#allocation3], %s215
        %s217 = sand.u32 %s49, 1
        %s218 = smul.addr %s217, 8
        %s219 = scalar_lea.vmem [#allocation2], %s218
        // Predicated region
        $region29: #{tpu_custom_call.1} parent=27 // pred_check
          %p220 = pneg %p62
        $region30: #{tpu_custom_call.1} parent=27 // pred_check_branch
          %222 = sbr.rel (%p220) target = $region32
        $region31: #{tpu_custom_call.1} parent=27 // pred_region
          %224 = dma.done %s216, 128
        $region32: #{tpu_custom_call.1} parent=27 // pred_fallthru
          _
        %s225 = sand.u32 %s77, 1
        %s226 = scalar_lea.sflag [#allocation6], %s225
        %s227 = sand.u32 %s77, 1
        %s228 = smul.addr %s227, 2
        %s229 = scalar_lea.vmem [#allocation5], %s228
        // Predicated region
        $region33: #{tpu_custom_call.1} parent=27 // pred_check
          %p230 = pneg %p90
        $region34: #{tpu_custom_call.1} parent=27 // pred_check_branch
          %232 = sbr.rel (%p230) target = $region36
        $region35: #{tpu_custom_call.1} parent=27 // pred_region
          %234 = dma.done %s226, 32
        $region36: #{tpu_custom_call.1} parent=27 // pred_fallthru
          _
        %s235 = sand.u32 %s49, 1
        %s236 = scalar_lea.sflag [#allocation3], %s235
        %s237 = sand.u32 %s49, 1
        %s238 = smul.addr %s237, 8
        %s239 = scalar_lea.vmem [#allocation2], %s238
        %p240 = pneg %p62
        %p241 = pneg %p59
        %s242 = sand.u32 %s77, 1
        %s243 = scalar_lea.sflag [#allocation6], %s242
        %s244 = sand.u32 %s77, 1
        %s245 = smul.addr %s244, 2
        %s246 = scalar_lea.vmem [#allocation5], %s245
        %p247 = pneg %p90
        %p248 = pneg %p87
        %p249 = pneg %p118
        %p250 = pneg %p115
        %s251 = sand.u32 %s105, 1
        %s252 = scalar_lea.sflag [#allocation4], %s251
        %s253 = sand.u32 %s105, 1
        %s254 = scalar_lea.vmem [#allocation7], %s253
        %p255 = pneg %p146
        %p256 = pneg %p143
        %s257 = sand.u32 %s133, 1
        %s258 = scalar_lea.sflag [#allocation9], %s257
        %s259 = sand.u32 %s133, 1
        %s260 = scalar_lea.vmem [#allocation8], %s259
        %v261 = vld [vmem:[%s219] sm:$0x3]
        %v262 = vld [vmem:[%s219 + $0x2] sm:$0x3]
        %v263 = vld [vmem:[%s219 + $0x4] sm:$0x3]
        %v264 = vld [vmem:[%s219 + $0x6] sm:$0x3]
        %v265 = vld [vmem:[%s229] sm:$0x3]
        %vm266 = vcmp.eq.s32.totalorder %v265, 0
        %vm267 = vcmp.eq.s32.totalorder %v265, 1
        %vm268 = vcmp.eq.s32.totalorder %v265, 2
        %vm269 = vcmp.eq.s32.totalorder %v265, 3
        %v270 = vsel %vm266, 1, 0
        %v271 = vsel %vm267, 1, 0
        %v272 = vsel %vm268, 1, 0
        %v273 = vsel %vm269, 1, 0
        %v274 = vcvt.s32.f32 %v270
        %v275 = vcvt.s32.f32 %v271
        %v276 = vcvt.s32.f32 %v272
        %v277 = vcvt.s32.f32 %v273
        %vm278 = vcmask 1041408
        %v279 = vsel %vm278, %v261, -inf
        %v280 = vsel %vm278, %v262, -inf
        %v281 = vsel %vm278, %v263, -inf
        %v282 = vsel %vm278, %v264, -inf
        %v283 = vmax.f32 %v279, %v280
        %v284 = vmax.f32 %v281, %v282
        %v285 = vmax.f32 %v283, %v284
        %v286 = vsub.f32 %v261, %v285
        %v287 = vsub.f32 %v262, %v285
        %v288 = vsub.f32 %v263, %v285
        %v289 = vsub.f32 %v264, %v285
        %v290 = vmul.f32 %v286, 1.442695
        %v291 = vpow.pop %v290
        %v292 = vmul.f32 %v287, 1.442695
        %v293 = vpow.pop %v292
        %v294 = vmul.f32 %v288, 1.442695
        %v295 = vpow.pop %v294
        %v296 = vmul.f32 %v289, 1.442695
        %v297 = vpow.pop %v296
        %v298 = vsel %vm278, %v291, 0.0
        %v299 = vsel %vm278, %v293, 0.0
        %v300 = vadd.f32 %v298, %v299
        %v301 = vsel %vm278, %v295, 0.0
        %v302 = vadd.f32 %v300, %v301
        %v303 = vsel %vm278, %v297, 0.0
        %v304 = vadd.f32 %v302, %v303
        %v305 = vmul.f32 %v274, %v286
        %v306 = vmul.f32 %v275, %v287
        %v307 = vmul.f32 %v276, %v288
        %v308 = vmul.f32 %v277, %v289
        %v309 = vsel %vm278, %v305, 0.0
        %v310 = vsel %vm278, %v306, 0.0
        %v311 = vadd.f32 %v309, %v310
        %v312 = vsel %vm278, %v307, 0.0
        %v313 = vadd.f32 %v311, %v312
        %v314 = vsel %vm278, %v308, 0.0
        %v315 = vadd.f32 %v313, %v314
        %v316 = vmul.f32 %v274, %v291
        %v317 = vmul.f32 %v275, %v293
        %v318 = vmul.f32 %v276, %v295
        %v319 = vmul.f32 %v277, %v297
        %v320 = vsel %vm278, %v316, 0.0
        %v321 = vsel %vm278, %v317, 0.0
        %v322 = vadd.f32 %v320, %v321
        %v323 = vsel %vm278, %v318, 0.0
        %v324 = vadd.f32 %v322, %v323
        %v325 = vsel %vm278, %v319, 0.0
        %v326 = vadd.f32 %v324, %v325
        %v327 = vlog2.pop %v304
        %v328 = vmul.f32 %v327, 0.6931472
        %v329 = vsub.f32 %v328, %v315
        %v330 = vrcp.pop %v304
        %v331 = vmul.f32 %v304, %v330
        %v332 = vsub.f32 1.0, %v331
        %v333 = vmul.f32 %v330, %v332
        %v334 = vadd.f32 %v330, %v333
        %vm335 = vweird.f32 %v304
        %vm336 = vweird.f32 %v330
        %vm337 = vmor %vm335, %vm336
        %v338 = vsel %vm337, %v330, %v334
        %v339 = vand.u32 2147483647, %v304
        %vm340 = vcmp.eq.f32.partialorder %v339, 8.507059e+37
        %v341 = vand.u32 %v304, 2147483648
        %v342 = vor.u32 1.1754944e-38, %v341
        %v343 = vsel %vm340, %v342, %v338
        %v344 = vmul.f32 %v326, %v343
        %v345 = vmul.f32 %v344, 0.99998665
        %v346 = vadd.f32 %v345, 3.3333333e-06
        %v347 = vadd.f32 %v346, 1e-05
        %v348 = vsub.f32 1.0, %v347
        %v349 = vmul.f32 %v348, %v348
        %v350 = vsub.f32 0.0, %v349
        %v351 = vlog2.pop %v347
        %v352 = vmul.f32 %v351, 0.6931472
        %v353 = vmul.f32 %v350, %v352
        %v354 = vsel %vm278, %v329, 0.0
        %355 = vadd.xlane.f32.xlu0 %v354
        %v356 = vpop.xlane.xlu0 %355
        %v357 = vrot.slane %v356, 4
        %v358 = vadd.f32 %v356, %v357
        %v359 = vrot.slane %v358, 2
        %v360 = vadd.f32 %v358, %v359
        %v361 = vrot.slane %v360, 1
        %v362 = vadd.f32 %v360, %v361
        %s363 = vtos %v362
        %v364 = vstv %s363
        %365 = vst [vmem:[%s254] sm:$0x1] %v364
        %v366 = vsel %vm278, %v353, 0.0
        %367 = vadd.xlane.f32.xlu0 %v366
        %v368 = vpop.xlane.xlu0 %367
        %v369 = vrot.slane %v368, 4
        %v370 = vadd.f32 %v368, %v369
        %v371 = vrot.slane %v370, 2
        %v372 = vadd.f32 %v370, %v371
        %v373 = vrot.slane %v372, 1
        %v374 = vadd.f32 %v372, %v373
        %s375 = vtos %v374
        %v376 = vstv %s375
        %377 = vst [vmem:[%s260] sm:$0x1] %v376
        %s378 = sand.u32 %s105, 1
        %s379 = scalar_lea.sflag [#allocation4], %s378
        %s380 = sand.u32 %s105, 1
        %s381 = scalar_lea.vmem [#allocation7], %s380
        %s382 = sand.u32 %s133, 1
        %s383 = scalar_lea.sflag [#allocation9], %s382
        %s384 = sand.u32 %s133, 1
        %s385 = scalar_lea.vmem [#allocation8], %s384
        // Predicated region
        $region37: #{tpu_custom_call.1} parent=27 // pred_check
          %p386 = pneg %p115
        $region38: #{tpu_custom_call.1} parent=27 // pred_check_branch
          %388 = sbr.rel (%p386) target = $region40
        $region39: #{tpu_custom_call.1} parent=27 // pred_region
          %390 = vsyncadd %s379, 0
          %s391 = sadd.s32 %s32, %s31
          %s392 = scalar_lea.hbm %s2, %s391
          %s394 = sshll.u32 %s381, 4
          %s395 = int_to_ptr.vmem [resolvable:$true] %s394
          %s396 = sshll.u32 %s392, 4
          %s397 = int_to_ptr.hbm [resolvable:$true] %s396
          %399 = dma.vmem_to_hbm [thread:$0]  %s395, 16, %s397, %s379
        $region40: #{tpu_custom_call.1} parent=27 // pred_fallthru
          _
        // Predicated region
        $region41: #{tpu_custom_call.1} parent=27 // pred_check
          %p400 = pneg %p143
        $region42: #{tpu_custom_call.1} parent=27 // pred_check_branch
          %402 = sbr.rel (%p400) target = $region44
        $region43: #{tpu_custom_call.1} parent=27 // pred_region
          %404 = vsyncadd %s383, 0
          %s405 = sadd.s32 %s32, %s31
          %s406 = scalar_lea.hbm %s3, %s405
          %s408 = sshll.u32 %s385, 4
          %s409 = int_to_ptr.vmem [resolvable:$true] %s408
          %s410 = sshll.u32 %s406, 4
          %s411 = int_to_ptr.hbm [resolvable:$true] %s410
          %413 = dma.vmem_to_hbm [thread:$0]  %s409, 16, %s411, %s383
        $region44: #{tpu_custom_call.1} parent=27 // pred_fallthru
          _
      $region28: #{tpu_custom_call.1} parent=5 // pred_fallthru
        _
      %p414 = scmp.le.s32.totalorder 2, %s22
      // Predicated region
      $region45: #{tpu_custom_call.1} parent=5 // pred_check
        %p415 = pneg %p414
      $region46: #{tpu_custom_call.1} parent=5 // pred_check_branch
        %417 = sbr.rel (%p415) target = $region48
      $region47: #{tpu_custom_call.1} parent=5 // pred_region
        %s418 = ssub.s32 %s22, 2
        // Predicated region
        $region49: #{tpu_custom_call.1} parent=47 // pred_check
          %p419 = pneg %p121
        $region50: #{tpu_custom_call.1} parent=47 // pred_check_branch
          %421 = sbr.rel (%p419) target = $region52
        $region51: #{tpu_custom_call.1} parent=47 // pred_region
          %s422 = sand.u32 %s106, 1
          %s423 = scalar_lea.sflag [#allocation4], %s422
          %s424 = sand.u32 %s106, 1
          %s425 = scalar_lea.vmem [#allocation7], %s424
          %427 = dma.done %s423, 16
        $region52: #{tpu_custom_call.1} parent=47 // pred_fallthru
          _
        // Predicated region
        $region53: #{tpu_custom_call.1} parent=47 // pred_check
          %p428 = pneg %p149
        $region54: #{tpu_custom_call.1} parent=47 // pred_check_branch
          %430 = sbr.rel (%p428) target = $region56
        $region55: #{tpu_custom_call.1} parent=47 // pred_region
          %s431 = sand.u32 %s134, 1
          %s432 = scalar_lea.sflag [#allocation9], %s431
          %s433 = sand.u32 %s134, 1
          %s434 = scalar_lea.vmem [#allocation8], %s433
          %436 = dma.done %s432, 16
        $region56: #{tpu_custom_call.1} parent=47 // pred_fallthru
          _
      $region48: #{tpu_custom_call.1} parent=5 // pred_fallthru
        _
    $region6: #{tpu_custom_call.1} parent=1 // loop_footer
      %s26 = sadd.s32 1, %s22
    $region7: #{tpu_custom_call.1} parent=1 // loop_footer_branch
      %21 = sbr.rel target = $region3
    $region8: #{tpu_custom_call.1} parent=1 // loop_exit
      _
    %437 = vsyncpa [#allocation3], 1
    %s438 = scalar_lea.sflag [#allocation3], 1
    %439 = vsyncpa %s438, 1
    %440 = vsyncpa [#allocation6], 1
    %s441 = scalar_lea.sflag [#allocation6], 1
    %442 = vsyncpa %s441, 1
    %443 = vsyncpa [#allocation4], 1
    %s444 = scalar_lea.sflag [#allocation4], 1
    %445 = vsyncpa %s444, 1
    %446 = vsyncpa [#allocation9], 1
    %s447 = scalar_lea.sflag [#allocation9], 1
    %448 = vsyncpa %s447, 1

</llo_original>
